<compile_context>
chip_gen: v7x
topology: tpu7x:2x2x1
jax: 0.10.0
libtpu: 0.0.40
codegen_flags: <defaults>
</compile_context>

<pallas_src>
import functools

import numpy as np
import jax
import jax.numpy as jnp
from jax.experimental import pallas as pl
from jax.experimental.pallas import tpu as pltpu

TOP_K = 1

# Mirrors the module-level `period_weight` histogram side effect.
period_weight_hist = np.zeros([50])


def fft_for_period(x, k=TOP_K):
    """Port of FFT_for_Period, fully on-device (no host sync).

    Returns (top_list, period_amplitudes) where period_amplitudes is (B, k).
    """
    # TODO(synk): rfft / top_k have no Pallas TPU primitive; computed with XLA.
    xf = jnp.fft.rfft(x, axis=1)
    amp = jnp.abs(xf)                                   # (B, F, N)
    frequency_list = amp.mean(axis=0).mean(axis=-1)     # (F,)
    frequency_list = frequency_list.at[0].set(-1.0)
    _, top_list = jax.lax.top_k(frequency_list, k)      # (k,)
    pw = jnp.take(amp.mean(axis=-1), top_list, axis=1)  # (B, k)
    return top_list, pw


def update_period_weight_hist(x, top_list, k=TOP_K):
    """Module-global histogram side effect (host sync), off the forward path."""
    top_np = np.asarray(jax.device_get(top_list))
    period = x.shape[1] // top_np
    for i, p in enumerate(period):
        if p < 50:
            period_weight_hist[p] += k - i


def _timesblock_kernel(s_ref, x_ref, w_ref, b_ref, o_ref):
    """out = (x @ W_blockdiag + bias) * scale[b] + x  for one packed row tile.

    s_ref : SMEM (B,)           per-batch sum of softmax(period_weight)
    x_ref : VMEM (tile_r, P*N)  packed rows (P consecutive time steps / row)
    w_ref : VMEM (P*N, P*N)     block-diagonal repeat of W^T  (in, out)
    b_ref : VMEM (1, P*N)       conv bias tiled P times
    o_ref : VMEM (tile_r, P*N)
    """
    scale = s_ref[pl.program_id(0)]                 # per-batch scalar from SMEM
    x = x_ref[...]
    conv = jnp.dot(x, w_ref[...], preferred_element_type=jnp.float32)
    conv = conv + b_ref[...]
    o_ref[...] = (conv * scale + x.astype(jnp.float32)).astype(o_ref.dtype)


def _pack_factor(seq_len, n):
    """Largest p in {4, 2, 1} dividing seq_len with p*n <= 128 lanes."""
    target = max(1, 128 // max(n, 1))
    for cand in (4, 2, 1):
        if cand <= target and seq_len % cand == 0:
            return cand
    return 1


@functools.partial(jax.jit, static_argnums=(3, 4))
def timesblock_forward(x, conv_weight, conv_bias, seq_len, top_k):
    B, T, N = x.shape
    assert seq_len == T

    top_list, pw = fft_for_period(x, top_k)                 # (k,), (B, k)
    pw_soft = jax.nn.softmax(pw, axis=1).astype(jnp.float32)
    # All k branches of the original loop are the same pointwise conv, so the
    # weighted sum collapses to conv * sum_i softmax(...)[b, i] (== 1 up to
    # rounding); kept as a per-batch SMEM scalar for semantic fidelity.
    pw_sum = jnp.sum(pw_soft, axis=1)                       # (B,)

    # Lane-dense packing: P consecutive time steps share one 128-lane row.
    # (If T is odd or N >= 128, P falls back to 1: correct, just masked stores.)
    P = _pack_factor(T, N)
    PN = P * N
    T_p = T // P
    x_packed = x.reshape(B, T_p, PN)                        # contiguous view

    # Conv2d(N, N, 1): out = x @ W^T + bias.  Pre-transpose to (in, out) on the
    # host and expand to a block-diagonal (PN, PN) so packed time steps stay
    # independent; extra zero-block multiplies are free (HBM-bound kernel).
    w_in_out = conv_weight.reshape(N, N).T.astype(jnp.float32)        # (in, out)
    w_block = jnp.kron(jnp.eye(P, dtype=jnp.float32), w_in_out)       # (PN, PN)
    b_block = jnp.tile(conv_bias.reshape(1, N).astype(jnp.float32), (1, P))

    # Biggest row tile that comfortably fits VMEM (1024x128 f32 = 512 KiB per
    # buffer); at the demo shape one batch fits in a single tile.
    tile_r = T_p if T_p <= 1024 else 1024
    grid = (B, pl.cdiv(T_p, tile_r))

    out_packed = pl.pallas_call(
        _timesblock_kernel,
        out_shape=jax.ShapeDtypeStruct((B, T_p, PN), x.dtype),
        grid=grid,
        in_specs=[
            # Per-batch scale: whole (B,) array resident in SMEM, no HBM stream.
            pl.BlockSpec(memory_space=pltpu.MemorySpace.SMEM),
            # Packed activations; batch dim squeezed out of the kernel ref.
            pl.BlockSpec((None, tile_r, PN), lambda b, t: (b, t, 0)),
            # Block-diagonal weight and tiled bias stay resident in VMEM.
            pl.BlockSpec((PN, PN), lambda b, t: (0, 0)),
            pl.BlockSpec((1, PN), lambda b, t: (0, 0)),
        ],
        out_specs=pl.BlockSpec((None, tile_r, PN), lambda b, t: (b, t, 0)),
        compiler_params=pltpu.CompilerParams(
            dimension_semantics=("parallel", "parallel")),
    )(pw_sum, x_packed, w_block, b_block)

    return out_packed.reshape(B, T, N), top_list


def timesblock_reference(x, conv_weight, conv_bias, seq_len, top_k):
    """Pure-JAX reference mirroring the torch forward."""
    B, T, N = x.shape
    _, pw = fft_for_period(x, top_k)
    w = jax.nn.softmax(pw, axis=1)                            # (B, k)
    conv = jnp.einsum("btn,mn->btm", x, conv_weight.reshape(N, N)) + conv_bias
    res = jnp.stack([conv[:, :seq_len, :]] * top_k, axis=-1)  # (B, T, N, k)
    out = jnp.sum(res * w[:, None, None, :], axis=-1) + x
    return out


if __name__ == "__main__":
    # Small shapes implied by the module: B batch, T = seq_len, N = d_model.
    B, T, N = 2, 16, 32
    seq_len, top_k, d_model, num_kernels = T, TOP_K, N, 6  # num_kernels unused

    key = jax.random.PRNGKey(0)
    kx, kw, kb = jax.random.split(key, 3)
    x = jax.random.normal(kx, (B, T, N), dtype=jnp.float32)
    # nn.Conv2d(d_model, d_model, 1): weight (N, N, 1, 1), bias (N,)
    conv_weight = 0.1 * jax.random.normal(kw, (N, N, 1, 1), dtype=jnp.float32)
    conv_bias = 0.1 * jax.random.normal(kb, (N,), dtype=jnp.float32)

    out, top_list = timesblock_forward(x, conv_weight, conv_bias, seq_len, top_k)
    out = jax.block_until_ready(out)

    ref = jax.block_until_ready(
        timesblock_reference(x, conv_weight, conv_bias, seq_len, top_k))
    np.testing.assert_allclose(np.asarray(out), np.asarray(ref),
                               rtol=1e-2, atol=1e-2)

    # Module-global histogram side effect, reusing the forward's top_list
    # (no second rfft), kept off the kernel's critical path.
    update_period_weight_hist(x, top_list, top_k)

    print("KERNEL_OK")
</pallas_src>

<mosaic_0001>
module attributes {stable_mosaic.version = 11 : i64} {
  func.func @_timesblock_kernel(%arg0: i32, %arg1: i32, %arg2: memref<2xf32, #tpu.memory_space<smem>>, %arg3: memref<1x4x128xf32, #tpu.memory_space<vmem>>, %arg4: memref<128x128xf32, #tpu.memory_space<vmem>>, %arg5: memref<1x128xf32, #tpu.memory_space<vmem>>, %arg6: memref<1x4x128xf32, #tpu.memory_space<vmem>>) attributes {dimension_semantics = [#tpu.dimension_semantics<parallel>, #tpu.dimension_semantics<parallel>], iteration_bounds = array<i64: 2, 1>, scalar_prefetch = 0 : i64, scratch_operands = 0 : i64, tpu.core_type = #tpu.core_type<tc>, window_params = [{transform_indices = @transform_0, window_bounds = array<i64: 2>}, {transform_indices = @transform_1, window_bounds = array<i64: 1, 4, 128>}, {pipeline_mode = #tpu.pipeline_mode<synchronous>, transform_indices = @transform_2, window_bounds = array<i64: 128, 128>}, {pipeline_mode = #tpu.pipeline_mode<synchronous>, transform_indices = @transform_3, window_bounds = array<i64: 1, 128>}, {transform_indices = @transform_4, window_bounds = array<i64: 1, 4, 128>}]} {
    %0 = arith.index_cast %arg0 : i32 to index
    %1 = memref.load %arg2[%0] : memref<2xf32, #tpu.memory_space<smem>>
    %c0 = arith.constant 0 : index
    %c0_0 = arith.constant 0 : index
    %c0_1 = arith.constant 0 : index
    %2 = vector.load %arg3[%c0, %c0_0, %c0_1] : memref<1x4x128xf32, #tpu.memory_space<vmem>>, vector<1x4x128xf32>
    %3 = vector.shape_cast %2 : vector<1x4x128xf32> to vector<4x128xf32>
    %c0_2 = arith.constant 0 : index
    %c0_3 = arith.constant 0 : index
    %4 = vector.load %arg4[%c0_2, %c0_3] : memref<128x128xf32, #tpu.memory_space<vmem>>, vector<128x128xf32>
    %cst = arith.constant dense<0.000000e+00> : vector<4x128xf32>
    %5 = tpu.matmul %3, %4, %cst {dimension_numbers = #tpu.dot_dimension_numbers<[1], [0], [0], [1], [0, 0, 1, 1], [], []>} : vector<4x128xf32>, vector<128x128xf32>, vector<4x128xf32> -> vector<4x128xf32>
    %c0_4 = arith.constant 0 : index
    %c0_5 = arith.constant 0 : index
    %6 = vector.load %arg5[%c0_4, %c0_5] : memref<1x128xf32, #tpu.memory_space<vmem>>, vector<1x128xf32>
    %7 = vector.broadcast %6 : vector<1x128xf32> to vector<4x128xf32>
    %8 = arith.addf %5, %7 : vector<4x128xf32>
    %9 = vector.broadcast %1 : f32 to vector<4x128xf32>
    %10 = arith.mulf %8, %9 : vector<4x128xf32>
    %11 = arith.addf %10, %3 : vector<4x128xf32>
    %c0_6 = arith.constant 0 : index
    %c0_7 = arith.constant 0 : index
    %c0_8 = arith.constant 0 : index
    %12 = vector.load %arg6[%c0_6, %c0_7, %c0_8] : memref<1x4x128xf32, #tpu.memory_space<vmem>>, vector<1x4x128xf32>
    %13 = vector.shape_cast %12 : vector<1x4x128xf32> to vector<4x128xf32>
    %14 = vector.shape_cast %11 : vector<4x128xf32> to vector<1x4x128xf32>
    tpu.vector_store %arg6[%c0_6, %c0_7, %c0_8], %14 {strides = array<i32>} : memref<1x4x128xf32, #tpu.memory_space<vmem>>, vector<1x4x128xf32>,
    return
  }
  func.func @transform_0(%arg0: i32, %arg1: i32) -> i32 {
    %c0_i32 = arith.constant 0 : i32
    %c0_i32_0 = arith.constant 0 : i32
    return %c0_i32 : i32
  }
  func.func @transform_1(%arg0: i32, %arg1: i32) -> (i32, i32, i32) {
    %c0_i32 = arith.constant 0 : i32
    %c0_i32_0 = arith.constant 0 : i32
    return %arg0, %arg1, %c0_i32 : i32, i32, i32
  }
  func.func @transform_2(%arg0: i32, %arg1: i32) -> (i32, i32) {
    %c0_i32 = arith.constant 0 : i32
    %c0_i32_0 = arith.constant 0 : i32
    %c0_i32_1 = arith.constant 0 : i32
    return %c0_i32, %c0_i32_0 : i32, i32
  }
  func.func @transform_3(%arg0: i32, %arg1: i32) -> (i32, i32) {
    %c0_i32 = arith.constant 0 : i32
    %c0_i32_0 = arith.constant 0 : i32
    %c0_i32_1 = arith.constant 0 : i32
    return %c0_i32, %c0_i32_0 : i32, i32
  }
  func.func @transform_4(%arg0: i32, %arg1: i32) -> (i32, i32, i32) {
    %c0_i32 = arith.constant 0 : i32
    %c0_i32_0 = arith.constant 0 : i32
    return %arg0, %arg1, %c0_i32 : i32, i32, i32
  }
}

</mosaic_0001>

<llo_original>
// kernel: timesblock_forward.1
$region0: #{timesblock_forward.1}
  #allocation0 [shape = 'u32[]', space=smem, size = 0x4, offset = 0x4, fixed_abs, tag = 'smem constant byte address 0x4 - core index']
  #allocation1 [shape = 'u32[144,128]{1,0:T(1,128)}', space=vmem, size = 0x12000, scoped, tag = 'internal scratch']
  %s0 = inlined_call_operand.vmem [shape: f32[2], index: 0, kind: input, shape index: {}]
  %s1 = inlined_call_operand.vmem [shape: f32[2,4,128], index: 1, kind: input, shape index: {}]
  %s2 = inlined_call_operand.vmem [shape: f32[128,128], index: 2, kind: input, shape index: {}]
  %s3 = inlined_call_operand.vmem [shape: f32[1,128], index: 3, kind: input, shape index: {}]
  %s4 = inlined_call_operand.vmem [shape: f32[2,4,128], index: 4, kind: output, shape index: {}]
  %s5 = sld [smem:[#allocation0]]
  $region53: #{timesblock_forward.1} parent=0
    _
  %s7 = ssub.s32 1, %s5
  %s8 = scalar_select 0, %s7, %s5
  $region1: #{timesblock_forward.1} parent=0
    #allocation2 [shape = 'u8[512]{0}', space=smem, size = 0x200, scoped, tag = 'input window, operand 0, single buffered']
    #allocation3 [shape = 's32[2]{0}', space=sflag, size = 0x8, scoped, tag = 'scoped memory for timesblock_forward.1']
    %9 = vsyncpa [#allocation3], 0
    loop: start=0, step=1, limit=4
    $region2: #{timesblock_forward.1} parent=1 // loop_pre_header
      _
    $region3: #{timesblock_forward.1} parent=1 // loop_header
      %s11 = sphi 0, %s15
      %p12 = scmp.ge.s32.totalorder %s11, 4
      %s18 = sphi 0, %s30
      %s19 = sphi 0, %s26
      %s20 = sphi 0, %s18
      %s21 = sphi 0, %s19
      %s22 = sphi 0, %s20
      %s23 = sphi 0, %s21
      %s31 = sphi 0, %s31
      %s33 = sphi 0, %s31
      %s34 = sphi 0, %s33
      %s48 = sphi 0, %s34
      %s56 = sphi 0, %s58
      %s59 = sphi 0, %s56
      %s60 = sphi 0, %s59
      %s76 = sphi 0, %s60
      %s80 = sphi 0, %s80
      %s82 = sphi 0, %s80
      %s83 = sphi 0, %s82
      %s97 = sphi 0, %s83
      %s101 = sphi 0, %s101
      %s103 = sphi 0, %s101
      %s104 = sphi 0, %s103
      %s118 = sphi 0, %s104
      %s126 = sphi 0, %s128
      %s129 = sphi 0, %s126
      %s130 = sphi 0, %s129
      %s146 = sphi 0, %s130
    $region4: #{timesblock_forward.1} parent=1 // loop_header_branch
      %14 = sbr.rel (%p12) target = $region8
    $region5: #{timesblock_forward.1} parent=1 // loop_body
      %s16 = ssub.s32 %s11, 1
      %s17 = ssub.s32 %s11, 2
      %s24 = sadd.s32 1, %s19
      %p25 = scmp.ge.s32.totalorder %s24, 1
      %s26 = scalar_select %p25, 0, %s24
      %s27 = sadd.s32 1, %s18
      %s28 = scalar_select %p25, %s27, %s18
      %p29 = scmp.ge.s32.totalorder %s28, 2
      %s30 = scalar_select %p29, 0, %s28
      %s32 = sadd.s32 %s31, 1
      %p35 = scmp.eq.s32.totalorder %s11, 1
      %p36 = scmp.ne.s32.totalorder %s31, %s33
      %p37 = scmp.eq.s32.totalorder %s11, 0
      %p38 = por %p36, %p37
      %p39 = scmp.ne.s32.totalorder %s31, %s33
      %p40 = scmp.eq.s32.totalorder %s16, 1
      %p41 = por %p39, %p40
      %p42 = scmp.ne.s32.totalorder %s33, %s34
      %p43 = scmp.eq.s32.totalorder %s16, 0
      %p44 = por %p42, %p43
      %p45 = scmp.ne.s32.totalorder %s33, %s34
      %p46 = scmp.eq.s32.totalorder %s17, 1
      %p47 = por %p45, %p46
      %p49 = scmp.ne.s32.totalorder %s34, %s48
      %p50 = scmp.eq.s32.totalorder %s17, 0
      %p51 = por %p49, %p50
      %s52 = ssub.s32 %s18, %s30
      %s53 = ssub.s32 %s19, %s26
      %s54 = sor.u32 %s52, %s53
      %p55 = scmp.eq.s32.totalorder %s54, 0
      %s57 = sadd.s32 %s56, 1
      %s58 = scalar_select %p55, %s56, %s57
      %p61 = pneg %p55
      %p62 = scmp.eq.s32.totalorder %s11, 1
      %p63 = por %p61, %p62
      %p64 = scmp.ne.s32.totalorder %s56, %s59
      %p65 = scmp.eq.s32.totalorder %s11, 0
      %p66 = por %p64, %p65
      %p67 = scmp.ne.s32.totalorder %s56, %s59
      %p68 = scmp.eq.s32.totalorder %s16, 1
      %p69 = por %p67, %p68
      %p70 = scmp.ne.s32.totalorder %s59, %s60
      %p71 = scmp.eq.s32.totalorder %s16, 0
      %p72 = por %p70, %p71
      %p73 = scmp.ne.s32.totalorder %s59, %s60
      %p74 = scmp.eq.s32.totalorder %s17, 1
      %p75 = por %p73, %p74
      %p77 = scmp.ne.s32.totalorder %s60, %s76
      %p78 = scmp.eq.s32.totalorder %s17, 0
      %p79 = por %p77, %p78
      %s81 = sadd.s32 %s80, 1
      %p84 = scmp.eq.s32.totalorder %s11, 1
      %p85 = scmp.ne.s32.totalorder %s80, %s82
      %p86 = scmp.eq.s32.totalorder %s11, 0
      %p87 = por %p85, %p86
      %p88 = scmp.ne.s32.totalorder %s80, %s82
      %p89 = scmp.eq.s32.totalorder %s16, 1
      %p90 = por %p88, %p89
      %p91 = scmp.ne.s32.totalorder %s82, %s83
      %p92 = scmp.eq.s32.totalorder %s16, 0
      %p93 = por %p91, %p92
      %p94 = scmp.ne.s32.totalorder %s82, %s83
      %p95 = scmp.eq.s32.totalorder %s17, 1
      %p96 = por %p94, %p95
      %p98 = scmp.ne.s32.totalorder %s83, %s97
      %p99 = scmp.eq.s32.totalorder %s17, 0
      %p100 = por %p98, %p99
      %s102 = sadd.s32 %s101, 1
      %p105 = scmp.eq.s32.totalorder %s11, 1
      %p106 = scmp.ne.s32.totalorder %s101, %s103
      %p107 = scmp.eq.s32.totalorder %s11, 0
      %p108 = por %p106, %p107
      %p109 = scmp.ne.s32.totalorder %s101, %s103
      %p110 = scmp.eq.s32.totalorder %s16, 1
      %p111 = por %p109, %p110
      %p112 = scmp.ne.s32.totalorder %s103, %s104
      %p113 = scmp.eq.s32.totalorder %s16, 0
      %p114 = por %p112, %p113
      %p115 = scmp.ne.s32.totalorder %s103, %s104
      %p116 = scmp.eq.s32.totalorder %s17, 1
      %p117 = por %p115, %p116
      %p119 = scmp.ne.s32.totalorder %s104, %s118
      %p120 = scmp.eq.s32.totalorder %s17, 0
      %p121 = por %p119, %p120
      %s122 = ssub.s32 %s18, %s30
      %s123 = ssub.s32 %s19, %s26
      %s124 = sor.u32 %s122, %s123
      %p125 = scmp.eq.s32.totalorder %s124, 0
      %s127 = sadd.s32 %s126, 1
      %s128 = scalar_select %p125, %s126, %s127
      %p131 = pneg %p125
      %p132 = scmp.eq.s32.totalorder %s11, 1
      %p133 = por %p131, %p132
      %p134 = scmp.ne.s32.totalorder %s126, %s129
      %p135 = scmp.eq.s32.totalorder %s11, 0
      %p136 = por %p134, %p135
      %p137 = scmp.ne.s32.totalorder %s126, %s129
      %p138 = scmp.eq.s32.totalorder %s16, 1
      %p139 = por %p137, %p138
      %p140 = scmp.ne.s32.totalorder %s129, %s130
      %p141 = scmp.eq.s32.totalorder %s16, 0
      %p142 = por %p140, %p141
      %p143 = scmp.ne.s32.totalorder %s129, %s130
      %p144 = scmp.eq.s32.totalorder %s17, 1
      %p145 = por %p143, %p144
      %p147 = scmp.ne.s32.totalorder %s130, %s146
      %p148 = scmp.eq.s32.totalorder %s17, 0
      %p149 = por %p147, %p148
      %p150 = scmp.le.s32.totalorder 1, %s11
      %p151 = scmp.lt.s32.totalorder %s11, 3
      %p152 = pnand %p150, %p151
      %p153 = pneg %p152
      // Predicated region
      $region9: #{timesblock_forward.1} parent=5 // pred_check
        _
      $region10: #{timesblock_forward.1} parent=5 // pred_check_branch
        %155 = sbr.rel (%p152) target = $region12
      $region11: #{timesblock_forward.1} parent=5 // pred_region
        %s156 = ssub.s32 %s11, 1
        // Predicated region
        $region13: #{timesblock_forward.1} parent=11 // pred_check
          %p157 = pneg %p44
        $region14: #{timesblock_forward.1} parent=11 // pred_check_branch
          %159 = sbr.rel (%p157) target = $region16
        $region15: #{timesblock_forward.1} parent=11 // pred_region
          %s161 = ssub.s32 16, 16
          %162 = vsyncadd [#allocation3], %s161
          %s164 = sshll.u32 %s0, 4
          %s165 = int_to_ptr.vmem [resolvable:$true] %s164
          %167 = dma.vmem_to_smem %s165, 16, [#allocation2], [#allocation3]
        $region16: #{timesblock_forward.1} parent=11 // pred_fallthru
          _
        // Predicated region
        $region17: #{timesblock_forward.1} parent=11 // pred_check
          %p168 = pneg %p93
        $region18: #{timesblock_forward.1} parent=11 // pred_check_branch
          %170 = sbr.rel (%p168) target = $region20
        $region19: #{timesblock_forward.1} parent=11 // pred_region
          _
        $region20: #{timesblock_forward.1} parent=11 // pred_fallthru
          _
        // Predicated region
        $region21: #{timesblock_forward.1} parent=11 // pred_check
          %p171 = pneg %p114
        $region22: #{timesblock_forward.1} parent=11 // pred_check_branch
          %173 = sbr.rel (%p171) target = $region24
        $region23: #{timesblock_forward.1} parent=11 // pred_region
          _
        $region24: #{timesblock_forward.1} parent=11 // pred_fallthru
          _
      $region12: #{timesblock_forward.1} parent=5 // pred_fallthru
        _
      %p174 = scmp.lt.s32.totalorder %s11, 2
      // Predicated region
      $region25: #{timesblock_forward.1} parent=5 // pred_check
        %p175 = pneg %p174
      $region26: #{timesblock_forward.1} parent=5 // pred_check_branch
        %177 = sbr.rel (%p175) target = $region28
      $region27: #{timesblock_forward.1} parent=5 // pred_region
        // Predicated region
        $region29: #{timesblock_forward.1} parent=27 // pred_check
          %p178 = pneg %p66
        $region30: #{timesblock_forward.1} parent=27 // pred_check_branch
          %180 = sbr.rel (%p178) target = $region32
        $region31: #{timesblock_forward.1} parent=27 // pred_region
          %p181 = scmp.lt.s32.totalorder %s18, 1
          %s182 = scalar_select %p181, %s18, 1
          %p183 = scmp.lt.s32.totalorder %s19, 0
          %s184 = scalar_select %p183, %s19, 0
          %s185 = sadd.s32 %s184, %s182
          %s186 = smul.addr %s185, 4
          %s187 = scalar_lea.vmem %s1, %s186
        $region32: #{timesblock_forward.1} parent=27 // pred_fallthru
          _
      $region28: #{timesblock_forward.1} parent=5 // pred_fallthru
        _
      %p188 = scmp.le.s32.totalorder 1, %s11
      %p189 = scmp.lt.s32.totalorder %s11, 3
      %p190 = pnand %p188, %p189
      %p191 = pneg %p190
      // Predicated region
      $region33: #{timesblock_forward.1} parent=5 // pred_check
        _
      $region34: #{timesblock_forward.1} parent=5 // pred_check_branch
        %193 = sbr.rel (%p190) target = $region36
      $region35: #{timesblock_forward.1} parent=5 // pred_region
        %s194 = ssub.s32 %s11, 1
        // Predicated region
        $region37: #{timesblock_forward.1} parent=35 // pred_check
          %p195 = pneg %p44
        $region38: #{timesblock_forward.1} parent=35 // pred_check_branch
          %197 = sbr.rel (%p195) target = $region40
        $region39: #{timesblock_forward.1} parent=35 // pred_region
          %198 = dma.done [#allocation3], 16
        $region40: #{timesblock_forward.1} parent=35 // pred_fallthru
          _
        %199 = sfence
        %p200 = pneg %p44
        %p201 = pneg %p41
        %p202 = scmp.lt.s32.totalorder %s20, 1
        %s203 = scalar_select %p202, %s20, 1
        %p204 = scmp.lt.s32.totalorder %s21, 0
        %s205 = scalar_select %p204, %s21, 0
        %s206 = sadd.s32 %s205, %s203
        %s207 = smul.addr %s206, 4
        %s208 = scalar_lea.vmem %s1, %s207
        %p209 = pneg %p72
        %p210 = pneg %p69
        %p211 = pneg %p93
        %p212 = pneg %p90
        %p213 = pneg %p114
        %p214 = pneg %p111
        %p215 = pneg %p142
        %p216 = pneg %p139
        %p217 = scmp.lt.s32.totalorder %s20, 1
        %s218 = scalar_select %p217, %s20, 1
        %p219 = scmp.lt.s32.totalorder %s21, 0
        %s220 = scalar_select %p219, %s21, 0
        %s221 = sadd.s32 %s220, %s218
        %s222 = smul.addr %s221, 4
        %s223 = scalar_lea.vmem %s4, %s222
        %p224 = scmp.lt.s32.totalorder %s20, 1
        %s225 = scalar_select %p224, %s20, 1
        %p226 = scmp.lt.s32.totalorder %s21, 0
        %s227 = scalar_select %p226, %s21, 0
        %s228 = sadd.s32 %s227, %s225
        %s229 = smul.addr %s228, 4
        %s230 = scalar_lea.vmem %s1, %s229
        %p231 = scmp.lt.s32.totalorder %s20, 1
        %s232 = scalar_select %p231, %s20, 1
        %p233 = scmp.lt.s32.totalorder %s21, 0
        %s234 = scalar_select %p233, %s21, 0
        %s235 = sadd.s32 %s234, %s232
        %s236 = smul.addr %s235, 4
        %s237 = scalar_lea.vmem %s4, %s236
        %s238 = sld [smem:[#allocation2 + %s20]]
        %v239 = vld [vmem:[%s230] sm:$0xf]
        %v240 = vld [vmem:[%s2] sm:$0xff]
        %v241 = vld [vmem:[%s2 + $0x8] sm:$0xff]
        %v242 = vld [vmem:[%s2 + $0x10] sm:$0xff]
        %v243 = vld [vmem:[%s2 + $0x18] sm:$0xff]
        %v244 = vld [vmem:[%s2 + $0x20] sm:$0xff]
        %v245 = vld [vmem:[%s2 + $0x28] sm:$0xff]
        %v246 = vld [vmem:[%s2 + $0x30] sm:$0xff]
        %v247 = vld [vmem:[%s2 + $0x38] sm:$0xff]
        %v248 = vld [vmem:[%s2 + $0x40] sm:$0xff]
        %v249 = vld [vmem:[%s2 + $0x48] sm:$0xff]
        %v250 = vld [vmem:[%s2 + $0x50] sm:$0xff]
        %v251 = vld [vmem:[%s2 + $0x58] sm:$0xff]
        %v252 = vld [vmem:[%s2 + $0x60] sm:$0xff]
        %v253 = vld [vmem:[%s2 + $0x68] sm:$0xff]
        %v254 = vld [vmem:[%s2 + $0x70] sm:$0xff]
        %v255 = vld [vmem:[%s2 + $0x78] sm:$0xff]
        %v256 = vld [vmem:[%s3] sm:$0x1]
        %v258 = vlaneseq
        %v259 = vshrl.u32 %v258, 7
        %v260 = vsub.s32 0, %v259
        %v261 = vrot.slane %v256, %v260
        %263 = vmatprep.subr.mxu0 0.0
        %264 = vmatpush1.msra.mxu0 %v240
        %265 = vmatprep.subr.mxu0 0.0
        %266 = vmatpush1.msra.mxu0 %v241
        %267 = vmatprep.subr.mxu0 0.0
        %268 = vmatpush1.msra.mxu0 %v242
        %269 = vmatprep.subr.mxu0 0.0
        %270 = vmatpush1.msra.mxu0 %v243
        %271 = vmatprep.subr.mxu0 0.0
        %272 = vmatpush1.msra.mxu0 %v244
        %273 = vmatprep.subr.mxu0 0.0
        %274 = vmatpush1.msra.mxu0 %v245
        %275 = vmatprep.subr.mxu0 0.0
        %276 = vmatpush1.msra.mxu0 %v246
        %277 = vmatprep.subr.mxu0 0.0
        %278 = vmatpush1.msra.mxu0 %v247
        %279 = vmatprep.subr.mxu0 0.0
        %280 = vmatpush1.msra.mxu0 %v248
        %281 = vmatprep.subr.mxu0 0.0
        %282 = vmatpush1.msra.mxu0 %v249
        %283 = vmatprep.subr.mxu0 0.0
        %284 = vmatpush1.msra.mxu0 %v250
        %285 = vmatprep.subr.mxu0 0.0
        %286 = vmatpush1.msra.mxu0 %v251
        %287 = vmatprep.subr.mxu0 0.0
        %288 = vmatpush1.msra.mxu0 %v252
        %289 = vmatprep.subr.mxu0 0.0
        %290 = vmatpush1.msra.mxu0 %v253
        %291 = vmatprep.subr.mxu0 0.0
        %292 = vmatpush1.msra.mxu0 %v254
        %293 = vmatprep.subr.mxu0 0.0
        %294 = vmatpush1.msra.mxu0 %v255
        %295 = vmatprep.subr.mxu0 0.0
        %296 = vmatpush1.msra.mxu0 0.0
        %297 = vmatprep.subr.mxu0 0.0
        %298 = vmatpush1.msra.mxu0 0.0
        %299 = vmatprep.subr.mxu0 0.0
        %300 = vmatpush1.msra.mxu0 0.0
        %301 = vmatprep.subr.mxu0 0.0
        %302 = vmatpush1.msra.mxu0 0.0
        %303 = vmatprep.subr.mxu0 0.0
        %304 = vmatpush1.msra.mxu0 0.0
        %305 = vmatprep.subr.mxu0 0.0
        %306 = vmatpush1.msra.mxu0 0.0
        %307 = vmatprep.subr.mxu0 0.0
        %308 = vmatpush1.msra.mxu0 0.0
        %309 = vmatprep.subr.mxu0 0.0
        %310 = vmatpush1.msra.mxu0 0.0
        %311 = vmatprep.subr.mxu0 0.0
        %312 = vmatpush1.msra.mxu0 0.0
        %313 = vmatprep.subr.mxu0 0.0
        %314 = vmatpush1.msra.mxu0 0.0
        %315 = vmatprep.subr.mxu0 0.0
        %316 = vmatpush1.msra.mxu0 0.0
        %317 = vmatprep.subr.mxu0 0.0
        %318 = vmatpush1.msra.mxu0 0.0
        %319 = vmatprep.subr.mxu0 0.0
        %320 = vmatpush1.msra.mxu0 0.0
        %321 = vmatprep.subr.mxu0 0.0
        %322 = vmatpush1.msra.mxu0 0.0
        %323 = vmatprep.subr.mxu0 0.0
        %324 = vmatpush1.msra.mxu0 0.0
        %325 = vmatprep.subr.mxu0 0.0
        %326 = vmatpush1.msra.mxu0 0.0
        %327 = vmatprep.mubr.f32.mxu0 0.0
        %328 = vmatmul.mubr.f32.gmra.mrb[0].mxu0 %v239
        %v329 = vpop.f32.mrb[0].mxu0
        %v330 = vadd.f32 %v261, %v329
        %v331 = vpop.f32.mrb[0].mxu0
        %332 = vdwg.mxu0
        %v333 = vstv %s238
        %v334 = vmul.f32 %v330, %v333
        %v335 = vadd.f32 %v334, %v239
        %336 = vst [vmem:[%s237] sm:$0xf] %v335
        %p337 = scmp.lt.s32.totalorder %s20, 1
        %s338 = scalar_select %p337, %s20, 1
        %p339 = scmp.lt.s32.totalorder %s21, 0
        %s340 = scalar_select %p339, %s21, 0
        %s341 = sadd.s32 %s340, %s338
        %s342 = smul.addr %s341, 4
        %s343 = scalar_lea.vmem %s4, %s342
        // Predicated region
        $region41: #{timesblock_forward.1} parent=35 // pred_check
          %p344 = pneg %p139
        $region42: #{timesblock_forward.1} parent=35 // pred_check_branch
          %346 = sbr.rel (%p344) target = $region44
        $region43: #{timesblock_forward.1} parent=35 // pred_region
          _
        $region44: #{timesblock_forward.1} parent=35 // pred_fallthru
          _
      $region36: #{timesblock_forward.1} parent=5 // pred_fallthru
        _
      %p347 = scmp.le.s32.totalorder 2, %s11
      // Predicated region
      $region45: #{timesblock_forward.1} parent=5 // pred_check
        %p348 = pneg %p347
      $region46: #{timesblock_forward.1} parent=5 // pred_check_branch
        %350 = sbr.rel (%p348) target = $region48
      $region47: #{timesblock_forward.1} parent=5 // pred_region
        %s351 = ssub.s32 %s11, 2
        // Predicated region
        $region49: #{timesblock_forward.1} parent=47 // pred_check
          %p352 = pneg %p145
        $region50: #{timesblock_forward.1} parent=47 // pred_check_branch
          %354 = sbr.rel (%p352) target = $region52
        $region51: #{timesblock_forward.1} parent=47 // pred_region
          %p355 = scmp.lt.s32.totalorder %s22, 1
          %s356 = scalar_select %p355, %s22, 1
          %p357 = scmp.lt.s32.totalorder %s23, 0
          %s358 = scalar_select %p357, %s23, 0
          %s359 = sadd.s32 %s358, %s356
          %s360 = smul.addr %s359, 4
          %s361 = scalar_lea.vmem %s4, %s360
        $region52: #{timesblock_forward.1} parent=47 // pred_fallthru
          _
      $region48: #{timesblock_forward.1} parent=5 // pred_fallthru
        _
    $region6: #{timesblock_forward.1} parent=1 // loop_footer
      %s15 = sadd.s32 1, %s11
    $region7: #{timesblock_forward.1} parent=1 // loop_footer_branch
      %10 = sbr.rel target = $region3
    $region8: #{timesblock_forward.1} parent=1 // loop_exit
      _
    %362 = vsyncpa [#allocation3], 1
    %s363 = scalar_lea.sflag [#allocation3], 1
    %364 = vsyncpa %s363, 1

</llo_original>
